<compile_context>
chip_gen: v5e
topology: v5e:2x2
jax: 0.10.0
libtpu: 0.0.40
codegen_flags: <defaults>
</compile_context>

<pallas_src>
import math

import jax
import jax.numpy as jnp
from jax.experimental import pallas as pl
from jax.experimental.pallas import tpu as pltpu

_LN_EPS = 1e-12
_GELU_C = math.sqrt(2.0 / math.pi)
_VMEM_LIMIT = 64 * 1024 * 1024  # raised above the 32 MiB scoped default


def _round_up(x, m):
    return (x + m - 1) // m * m


# --------- Kernel 1: dense(H,H) -> gelu_new -> LayerNorm -> project(H,E) ----
def _transform_project_kernel(x_ref, w1t_ref, b1_ref, g_ref, beta_ref,
                              wpt_ref, o_ref):
    # x: (TM, H) bf16   w1t: (H, H) bf16   b1/g/beta: (1, H) f32
    # wpt: (H, E_pad) bf16   o: (TM, E_pad) bf16
    h = jnp.dot(x_ref[...], w1t_ref[...],
                preferred_element_type=jnp.float32) + b1_ref[...]
    # hidden_act = 'gelu_new' (tanh approximation), computed in f32
    h = 0.5 * h * (1.0 + jnp.tanh(_GELU_C * (h + 0.044715 * h * h * h)))
    # LayerNorm over the hidden axis (biased variance, eps = 1e-12)
    mean = jnp.mean(h, axis=-1, keepdims=True)
    var = jnp.mean(jnp.square(h - mean), axis=-1, keepdims=True)
    h = (h - mean) * jax.lax.rsqrt(var + _LN_EPS)
    h = h * g_ref[...] + beta_ref[...]
    o_ref[...] = jnp.dot(h.astype(wpt_ref.dtype), wpt_ref[...],
                         preferred_element_type=jnp.float32).astype(o_ref.dtype)


# --------- Kernel 2: decoder (E -> V) + bias ---------------------------------
def _decoder_kernel(x_ref, wdt_ref, b_ref, o_ref):
    # x: (TM, E_pad) bf16   wdt: (E_pad, TV) bf16   b: (1, TV) f32   o: (TM, TV)
    o_ref[...] = (jnp.dot(x_ref[...], wdt_ref[...],
                          preferred_element_type=jnp.float32)
                  + b_ref[...]).astype(o_ref.dtype)


def albert_pretraining_heads(sequence_output, pooled_output, params, *,
                             tile_m=512, tile_v=2048,
                             logits_dtype=jnp.float32):
    """Forward pass of AlbertPreTrainingHeads.

    params (PyTorch Linear conventions, weight = (out_features, in_features)):
      dense_w (H,H), dense_b (H,), ln_g (H,), ln_b (H,),
      proj_w (E,H), dec_w (V,E), dec_bias (V,), sr_w (2,H), sr_b (2,)
    """
    B, S, H = sequence_output.shape
    E = params["proj_w"].shape[0]
    V = params["dec_w"].shape[0]

    # ---- flatten tokens; row tile is a multiple of 16 (bf16 sublane pack) ----
    M = B * S
    tm = min(tile_m, _round_up(M, 16))
    M_pad = _round_up(M, tm)
    grid_m = M_pad // tm

    x = sequence_output.reshape(M, H).astype(jnp.bfloat16)
    if M_pad != M:
        x = jnp.pad(x, ((0, M_pad - M), (0, 0)))

    # ---- pre-transposed bf16 weights (no in-kernel transposes) ----
    E_pad = _round_up(E, 128)
    w1t = params["dense_w"].T.astype(jnp.bfloat16)                     # (H, H)
    b1 = params["dense_b"].reshape(1, H).astype(jnp.float32)
    g = params["ln_g"].reshape(1, H).astype(jnp.float32)
    beta = params["ln_b"].reshape(1, H).astype(jnp.float32)
    wpt = jnp.pad(params["proj_w"].T.astype(jnp.bfloat16),
                  ((0, 0), (0, E_pad - E)))                            # (H, E_pad)

    proj = pl.pallas_call(
        _transform_project_kernel,
        out_shape=jax.ShapeDtypeStruct((M_pad, E_pad), jnp.bfloat16),
        grid_spec=pltpu.PrefetchScalarGridSpec(
            num_scalar_prefetch=0,
            grid=(grid_m,),
            in_specs=[
                pl.BlockSpec((tm, H), lambda i: (i, 0)),
                pl.BlockSpec((H, H), lambda i: (0, 0)),
                pl.BlockSpec((1, H), lambda i: (0, 0)),
                pl.BlockSpec((1, H), lambda i: (0, 0)),
                pl.BlockSpec((1, H), lambda i: (0, 0)),
                pl.BlockSpec((H, E_pad), lambda i: (0, 0)),
            ],
            out_specs=pl.BlockSpec((tm, E_pad), lambda i: (i, 0)),
        ),
        compiler_params=pltpu.CompilerParams(
            dimension_semantics=("parallel",),
            vmem_limit_bytes=_VMEM_LIMIT,
        ),
    )(x, w1t, b1, g, beta, wpt)
    # TODO(synk): for ALBERT-xlarge/xxlarge (H>=2048) on v7x (64 MiB VMEM),
    # single-buffer the grid-invariant (H,H) weight (pipeline_mode=pl.Buffered(1))
    # or add a K-tiling grid axis over H with a VMEM accumulator.

    # ---- decoder: (M, E) @ (E, V) + bias ------------------------------------
    tv = min(tile_v, _round_up(V, 128))
    V_pad = _round_up(V, tv)
    grid_v = V_pad // tv
    wdt = jnp.pad(params["dec_w"].T.astype(jnp.bfloat16),
                  ((0, E_pad - E), (0, V_pad - V)))                    # (E_pad, V_pad)
    dec_bias = jnp.pad(params["dec_bias"].reshape(1, V).astype(jnp.float32),
                       ((0, 0), (0, V_pad - V)))                       # (1, V_pad)

    # Grid = (V tiles outer, M tiles inner): the (E_pad, tv) weight tile is
    # invariant across the inner M axis (fetched from HBM once overall), and
    # the outer parallel V axis shards across v7x's two TensorCores.  Output
    # is written un-padded (M, V); Pallas masks only the ragged last tiles,
    # so no post-hoc slice copy of the logits is needed.
    scores = pl.pallas_call(
        _decoder_kernel,
        out_shape=jax.ShapeDtypeStruct((M, V), logits_dtype),
        grid_spec=pltpu.PrefetchScalarGridSpec(
            num_scalar_prefetch=0,
            grid=(grid_v, grid_m),
            in_specs=[
                pl.BlockSpec((tm, E_pad), lambda j, i: (i, 0)),
                pl.BlockSpec((E_pad, tv), lambda j, i: (0, j)),
                pl.BlockSpec((1, tv), lambda j, i: (0, j)),
            ],
            out_specs=pl.BlockSpec((tm, tv), lambda j, i: (i, j)),
        ),
        compiler_params=pltpu.CompilerParams(
            dimension_semantics=("parallel", "parallel"),
            vmem_limit_bytes=_VMEM_LIMIT,
        ),
    )(proj, wdt, dec_bias)

    prediction_scores = scores.reshape(B, S, V)

    # ---- seq_relationship: Linear(H -> 2) ------------------------------------
    # Left to plain XLA per perf review: a (B,H)@(H,2) matmul is dominated by
    # Pallas launch overhead and padding 2->128 lanes wastes 64x MXU columns.
    seq_relationship_score = pooled_output @ params["sr_w"].T + params["sr_b"]

    return prediction_scores, seq_relationship_score


if __name__ == "__main__":
    key = jax.random.PRNGKey(0)
    ks = jax.random.split(key, 11)

    # Small ALBERT-like shapes: batch=2, seq=8, hidden=32, embedding=16, vocab=128
    B, S, H, E, V = 2, 8, 32, 16, 128

    sequence_output = jax.random.normal(ks[0], (B, S, H), dtype=jnp.float32)
    pooled_output = jax.random.normal(ks[1], (B, H), dtype=jnp.float32)

    params = dict(
        dense_w=0.05 * jax.random.normal(ks[2], (H, H), jnp.float32),
        dense_b=0.01 * jax.random.normal(ks[3], (H,), jnp.float32),
        ln_g=1.0 + 0.05 * jax.random.normal(ks[4], (H,), jnp.float32),
        ln_b=0.01 * jax.random.normal(ks[5], (H,), jnp.float32),
        proj_w=0.05 * jax.random.normal(ks[6], (E, H), jnp.float32),
        dec_w=0.05 * jax.random.normal(ks[7], (V, E), jnp.float32),
        dec_bias=0.01 * jax.random.normal(ks[8], (V,), jnp.float32),
        sr_w=0.05 * jax.random.normal(ks[9], (2, H), jnp.float32),
        sr_b=0.01 * jax.random.normal(ks[10], (2,), jnp.float32),
    )

    pred, sr = albert_pretraining_heads(sequence_output, pooled_output, params)
    pred, sr = jax.block_until_ready((pred, sr))

    # ---- pure-JAX f32 reference ----
    def gelu_new(x):
        return 0.5 * x * (1.0 + jnp.tanh(_GELU_C * (x + 0.044715 * x ** 3)))

    h = sequence_output @ params["dense_w"].T + params["dense_b"]
    h = gelu_new(h)
    mean = jnp.mean(h, axis=-1, keepdims=True)
    var = jnp.mean(jnp.square(h - mean), axis=-1, keepdims=True)
    h = (h - mean) * jax.lax.rsqrt(var + _LN_EPS)
    h = h * params["ln_g"] + params["ln_b"]
    pred_ref = (h @ params["proj_w"].T) @ params["dec_w"].T + params["dec_bias"]
    sr_ref = pooled_output @ params["sr_w"].T + params["sr_b"]

    assert pred.shape == (B, S, V)
    assert sr.shape == (B, 2)
    # bf16 matmul operands (f32 accumulation) -> relaxed tolerance vs f32 ref.
    assert jnp.allclose(pred, pred_ref, atol=3e-2, rtol=3e-2)
    assert jnp.allclose(sr, sr_ref, atol=1e-5, rtol=1e-5)

    print("KERNEL_OK")
</pallas_src>

<mosaic_0001>
module attributes {stable_mosaic.version = 11 : i64} {
  func.func @_transform_project_kernel(%arg0: i32, %arg1: memref<16x32xbf16, #tpu.memory_space<vmem>>, %arg2: memref<32x32xbf16, #tpu.memory_space<vmem>>, %arg3: memref<1x32xf32, #tpu.memory_space<vmem>>, %arg4: memref<1x32xf32, #tpu.memory_space<vmem>>, %arg5: memref<1x32xf32, #tpu.memory_space<vmem>>, %arg6: memref<32x128xbf16, #tpu.memory_space<vmem>>, %arg7: memref<16x128xbf16, #tpu.memory_space<vmem>>) attributes {dimension_semantics = [#tpu.dimension_semantics<parallel>], iteration_bounds = array<i64: 1>, scalar_prefetch = 0 : i64, scratch_operands = 0 : i64, tpu.core_type = #tpu.core_type<tc>, window_params = [{transform_indices = @transform_0, window_bounds = array<i64: 16, 32>}, {pipeline_mode = #tpu.pipeline_mode<synchronous>, transform_indices = @transform_1, window_bounds = array<i64: 32, 32>}, {pipeline_mode = #tpu.pipeline_mode<synchronous>, transform_indices = @transform_2, window_bounds = array<i64: 1, 32>}, {pipeline_mode = #tpu.pipeline_mode<synchronous>, transform_indices = @transform_3, window_bounds = array<i64: 1, 32>}, {pipeline_mode = #tpu.pipeline_mode<synchronous>, transform_indices = @transform_4, window_bounds = array<i64: 1, 32>}, {pipeline_mode = #tpu.pipeline_mode<synchronous>, transform_indices = @transform_5, window_bounds = array<i64: 32, 128>}, {transform_indices = @transform_6, window_bounds = array<i64: 16, 128>}]} {
    %c0 = arith.constant 0 : index
    %c0_0 = arith.constant 0 : index
    %0 = vector.load %arg1[%c0, %c0_0] : memref<16x32xbf16, #tpu.memory_space<vmem>>, vector<16x32xbf16>
    %c0_1 = arith.constant 0 : index
    %c0_2 = arith.constant 0 : index
    %1 = vector.load %arg2[%c0_1, %c0_2] : memref<32x32xbf16, #tpu.memory_space<vmem>>, vector<32x32xbf16>
    %cst = arith.constant dense<0.000000e+00> : vector<16x32xf32>
    %2 = tpu.matmul %0, %1, %cst {dimension_numbers = #tpu.dot_dimension_numbers<[1], [0], [0], [1], [0, 0, 1, 1], [], []>} : vector<16x32xbf16>, vector<32x32xbf16>, vector<16x32xf32> -> vector<16x32xf32>
    %c0_3 = arith.constant 0 : index
    %c0_4 = arith.constant 0 : index
    %3 = vector.load %arg3[%c0_3, %c0_4] : memref<1x32xf32, #tpu.memory_space<vmem>>, vector<1x32xf32>
    %4 = vector.broadcast %3 : vector<1x32xf32> to vector<16x32xf32>
    %5 = arith.addf %2, %4 : vector<16x32xf32>
    %cst_5 = arith.constant 5.000000e-01 : f32
    %6 = vector.broadcast %cst_5 : f32 to vector<16x32xf32>
    %7 = arith.mulf %6, %5 : vector<16x32xf32>
    %cst_6 = arith.constant 4.471500e-02 : f32
    %8 = vector.broadcast %cst_6 : f32 to vector<16x32xf32>
    %9 = arith.mulf %8, %5 : vector<16x32xf32>
    %10 = arith.mulf %9, %5 : vector<16x32xf32>
    %11 = arith.mulf %10, %5 : vector<16x32xf32>
    %12 = arith.addf %5, %11 : vector<16x32xf32>
    %cst_7 = arith.constant 0.797884583 : f32
    %13 = vector.broadcast %cst_7 : f32 to vector<16x32xf32>
    %14 = arith.mulf %13, %12 : vector<16x32xf32>
    %15 = math.tanh %14 : vector<16x32xf32>
    %cst_8 = arith.constant 1.000000e+00 : f32
    %16 = vector.broadcast %cst_8 : f32 to vector<16x32xf32>
    %17 = arith.addf %16, %15 : vector<16x32xf32>
    %18 = arith.mulf %7, %17 : vector<16x32xf32>
    %cst_9 = arith.constant dense<0.000000e+00> : vector<16xf32>
    %19 = vector.multi_reduction <add>, %18, %cst_9 [1] : vector<16x32xf32> to vector<16xf32>
    %20 = vector.shape_cast %19 : vector<16xf32> to vector<16x1xf32>
    %cst_10 = arith.constant 3.200000e+01 : f32
    %21 = vector.broadcast %cst_10 : f32 to vector<16x1xf32>
    %22 = arith.divf %20, %21 : vector<16x1xf32>
    %23 = vector.broadcast %22 : vector<16x1xf32> to vector<16x32xf32>
    %24 = arith.subf %18, %23 : vector<16x32xf32>
    %25 = arith.mulf %24, %24 : vector<16x32xf32>
    %cst_11 = arith.constant dense<0.000000e+00> : vector<16xf32>
    %26 = vector.multi_reduction <add>, %25, %cst_11 [1] : vector<16x32xf32> to vector<16xf32>
    %27 = vector.shape_cast %26 : vector<16xf32> to vector<16x1xf32>
    %cst_12 = arith.constant 3.200000e+01 : f32
    %28 = vector.broadcast %cst_12 : f32 to vector<16x1xf32>
    %29 = arith.divf %27, %28 : vector<16x1xf32>
    %30 = vector.broadcast %22 : vector<16x1xf32> to vector<16x32xf32>
    %31 = arith.subf %18, %30 : vector<16x32xf32>
    %cst_13 = arith.constant 9.99999996E-13 : f32
    %32 = vector.broadcast %cst_13 : f32 to vector<16x1xf32>
    %33 = arith.addf %29, %32 : vector<16x1xf32>
    %34 = math.rsqrt %33 : vector<16x1xf32>
    %35 = vector.broadcast %34 : vector<16x1xf32> to vector<16x32xf32>
    %36 = arith.mulf %31, %35 : vector<16x32xf32>
    %c0_14 = arith.constant 0 : index
    %c0_15 = arith.constant 0 : index
    %37 = vector.load %arg4[%c0_14, %c0_15] : memref<1x32xf32, #tpu.memory_space<vmem>>, vector<1x32xf32>
    %38 = vector.broadcast %37 : vector<1x32xf32> to vector<16x32xf32>
    %39 = arith.mulf %36, %38 : vector<16x32xf32>
    %c0_16 = arith.constant 0 : index
    %c0_17 = arith.constant 0 : index
    %40 = vector.load %arg5[%c0_16, %c0_17] : memref<1x32xf32, #tpu.memory_space<vmem>>, vector<1x32xf32>
    %41 = vector.broadcast %40 : vector<1x32xf32> to vector<16x32xf32>
    %42 = arith.addf %39, %41 : vector<16x32xf32>
    %43 = arith.truncf %42 : vector<16x32xf32> to vector<16x32xbf16>
    %c0_18 = arith.constant 0 : index
    %c0_19 = arith.constant 0 : index
    %44 = vector.load %arg6[%c0_18, %c0_19] : memref<32x128xbf16, #tpu.memory_space<vmem>>, vector<32x128xbf16>
    %cst_20 = arith.constant dense<0.000000e+00> : vector<16x128xf32>
    %45 = tpu.matmul %43, %44, %cst_20 {dimension_numbers = #tpu.dot_dimension_numbers<[1], [0], [0], [1], [0, 0, 1, 1], [], []>} : vector<16x32xbf16>, vector<32x128xbf16>, vector<16x128xf32> -> vector<16x128xf32>
    %46 = arith.truncf %45 : vector<16x128xf32> to vector<16x128xbf16>
    %c0_21 = arith.constant 0 : index
    %c0_22 = arith.constant 0 : index
    %47 = vector.load %arg7[%c0_21, %c0_22] : memref<16x128xbf16, #tpu.memory_space<vmem>>, vector<16x128xbf16>
    tpu.vector_store %arg7[%c0_21, %c0_22], %46 {strides = array<i32>} : memref<16x128xbf16, #tpu.memory_space<vmem>>, vector<16x128xbf16>,
    return
  }
  func.func @transform_0(%arg0: i32) -> (i32, i32) {
    %c0_i32 = arith.constant 0 : i32
    %c0_i32_0 = arith.constant 0 : i32
    return %arg0, %c0_i32 : i32, i32
  }
  func.func @transform_1(%arg0: i32) -> (i32, i32) {
    %c0_i32 = arith.constant 0 : i32
    %c0_i32_0 = arith.constant 0 : i32
    %c0_i32_1 = arith.constant 0 : i32
    return %c0_i32, %c0_i32_0 : i32, i32
  }
  func.func @transform_2(%arg0: i32) -> (i32, i32) {
    %c0_i32 = arith.constant 0 : i32
    %c0_i32_0 = arith.constant 0 : i32
    %c0_i32_1 = arith.constant 0 : i32
    return %c0_i32, %c0_i32_0 : i32, i32
  }
  func.func @transform_3(%arg0: i32) -> (i32, i32) {
    %c0_i32 = arith.constant 0 : i32
    %c0_i32_0 = arith.constant 0 : i32
    %c0_i32_1 = arith.constant 0 : i32
    return %c0_i32, %c0_i32_0 : i32, i32
  }
  func.func @transform_4(%arg0: i32) -> (i32, i32) {
    %c0_i32 = arith.constant 0 : i32
    %c0_i32_0 = arith.constant 0 : i32
    %c0_i32_1 = arith.constant 0 : i32
    return %c0_i32, %c0_i32_0 : i32, i32
  }
  func.func @transform_5(%arg0: i32) -> (i32, i32) {
    %c0_i32 = arith.constant 0 : i32
    %c0_i32_0 = arith.constant 0 : i32
    %c0_i32_1 = arith.constant 0 : i32
    return %c0_i32, %c0_i32_0 : i32, i32
  }
  func.func @transform_6(%arg0: i32) -> (i32, i32) {
    %c0_i32 = arith.constant 0 : i32
    %c0_i32_0 = arith.constant 0 : i32
    return %arg0, %c0_i32 : i32, i32
  }
}

</mosaic_0001>

<llo_original>
// kernel: tpu_custom_call.1
$region0: #{tpu_custom_call.1}
  #allocation0 [shape = 'u32[]', space=smem, size = 0x4, offset = 0x4, fixed_abs, tag = 'smem constant byte address 0x4 - core index']
  #allocation1 [shape = 'u32[72,128]{1,0:T(1,128)}', space=vmem, size = 0x9000, scoped, tag = 'internal scratch']
  %s0 = inlined_call_operand.hbm [shape: bf16[16,32], index: 0, kind: input, shape index: {}]
  %s1 = inlined_call_operand.hbm [shape: bf16[32,32], index: 1, kind: input, shape index: {}]
  %s2 = inlined_call_operand.vmem [shape: f32[1,32], index: 2, kind: input, shape index: {}]
  %s3 = inlined_call_operand.vmem [shape: f32[1,32], index: 3, kind: input, shape index: {}]
  %s4 = inlined_call_operand.vmem [shape: f32[1,32], index: 4, kind: input, shape index: {}]
  %s5 = inlined_call_operand.hbm [shape: bf16[32,128], index: 5, kind: input, shape index: {}]
  %s6 = inlined_call_operand.hbm [shape: bf16[16,128], index: 6, kind: output, shape index: {}]
  %s7 = sld [smem:[#allocation0]]
  $region46: #{tpu_custom_call.1} parent=0
    _
  %s9 = ssub.s32 1, %s7
  %s10 = scalar_select 0, %s9, %s7
  $region1: #{tpu_custom_call.1} parent=0
    #allocation2 [shape = 'u8[4096]{0}', space=vmem, size = 0x1000, scoped, tag = 'input window, operand 0, single buffered']
    #allocation3 [shape = 's32[1]{0}', space=sflag, size = 0x4, scoped, tag = 'scoped memory for tpu_custom_call.1']
    #allocation4 [shape = 's32[1]{0}', space=sflag, size = 0x4, scoped, tag = 'scoped memory for tpu_custom_call.1']
    #allocation5 [shape = 'u8[8192]{0}', space=vmem, size = 0x2000, scoped, tag = 'input window, operand 1, single buffered']
    #allocation6 [shape = 's32[1]{0}', space=sflag, size = 0x4, scoped, tag = 'scoped memory for tpu_custom_call.1']
    #allocation7 [shape = 'u8[8192]{0}', space=vmem, size = 0x2000, scoped, tag = 'input window, operand 5, single buffered']
    #allocation8 [shape = 'u8[4096]{0}', space=vmem, size = 0x1000, scoped, tag = 'output window, operand 0, single buffered']
    %11 = vsyncpa [#allocation3], 0
    %12 = vsyncpa [#allocation6], 0
    %13 = vsyncpa [#allocation4], 0
    // Predicated region
    $region2: #{tpu_custom_call.1} parent=1 // pred_check
      _
    $region3: #{tpu_custom_call.1} parent=1 // pred_check_branch
      %15 = sbr.rel (0) target = $region5
    $region4: #{tpu_custom_call.1} parent=1 // pred_region
      %17 = vsyncadd [#allocation3], 0
      %s18 = sshll.u32 %s0, 4
      %s19 = int_to_ptr.hbm [resolvable:$true] %s18
      %s20 = sshll.u32 [#allocation2], 4
      %s21 = int_to_ptr.vmem [resolvable:$true] %s20
      %26 = dma.hbm_to_vmem [thread:$0]  %s19, 128, %s21, [#allocation3], 64, 64, 4
    $region5: #{tpu_custom_call.1} parent=1 // pred_fallthru
      _
    // Predicated region
    $region6: #{tpu_custom_call.1} parent=1 // pred_check
      _
    $region7: #{tpu_custom_call.1} parent=1 // pred_check_branch
      %28 = sbr.rel (0) target = $region9
    $region8: #{tpu_custom_call.1} parent=1 // pred_region
      %30 = vsyncadd [#allocation6], 0
      %s31 = sshll.u32 %s1, 4
      %s32 = int_to_ptr.hbm [resolvable:$true] %s31
      %s33 = sshll.u32 [#allocation5], 4
      %s34 = int_to_ptr.vmem [resolvable:$true] %s33
      %39 = dma.hbm_to_vmem [thread:$0]  %s32, 256, %s34, [#allocation6], 64, 64, 4
    $region9: #{tpu_custom_call.1} parent=1 // pred_fallthru
      _
    // Predicated region
    $region10: #{tpu_custom_call.1} parent=1 // pred_check
      _
    $region11: #{tpu_custom_call.1} parent=1 // pred_check_branch
      %41 = sbr.rel (0) target = $region13
    $region12: #{tpu_custom_call.1} parent=1 // pred_region
      _
    $region13: #{tpu_custom_call.1} parent=1 // pred_fallthru
      _
    // Predicated region
    $region14: #{tpu_custom_call.1} parent=1 // pred_check
      _
    $region15: #{tpu_custom_call.1} parent=1 // pred_check_branch
      %43 = sbr.rel (0) target = $region17
    $region16: #{tpu_custom_call.1} parent=1 // pred_region
      _
    $region17: #{tpu_custom_call.1} parent=1 // pred_fallthru
      _
    // Predicated region
    $region18: #{tpu_custom_call.1} parent=1 // pred_check
      _
    $region19: #{tpu_custom_call.1} parent=1 // pred_check_branch
      %45 = sbr.rel (0) target = $region21
    $region20: #{tpu_custom_call.1} parent=1 // pred_region
      _
    $region21: #{tpu_custom_call.1} parent=1 // pred_fallthru
      _
    // Predicated region
    $region22: #{tpu_custom_call.1} parent=1 // pred_check
      _
    $region23: #{tpu_custom_call.1} parent=1 // pred_check_branch
      %47 = sbr.rel (0) target = $region25
    $region24: #{tpu_custom_call.1} parent=1 // pred_region
      %49 = vsyncadd [#allocation6], 0
      %s50 = sshll.u32 %s5, 4
      %s51 = int_to_ptr.hbm [resolvable:$true] %s50
      %s52 = sshll.u32 [#allocation7], 4
      %s53 = int_to_ptr.vmem [resolvable:$true] %s52
      %58 = dma.hbm_to_vmem [thread:$0]  %s51, 256, %s53, [#allocation6], 64, 64, 4
    $region25: #{tpu_custom_call.1} parent=1 // pred_fallthru
      _
    // Predicated region
    $region26: #{tpu_custom_call.1} parent=1 // pred_check
      _
    $region27: #{tpu_custom_call.1} parent=1 // pred_check_branch
      %60 = sbr.rel (0) target = $region29
    $region28: #{tpu_custom_call.1} parent=1 // pred_region
      %62 = dma.done [#allocation3], 128
    $region29: #{tpu_custom_call.1} parent=1 // pred_fallthru
      _
    // Predicated region
    $region30: #{tpu_custom_call.1} parent=1 // pred_check
      _
    $region31: #{tpu_custom_call.1} parent=1 // pred_check_branch
      %64 = sbr.rel (0) target = $region33
    $region32: #{tpu_custom_call.1} parent=1 // pred_region
      %66 = dma.done [#allocation6], 256
    $region33: #{tpu_custom_call.1} parent=1 // pred_fallthru
      _
    // Predicated region
    $region34: #{tpu_custom_call.1} parent=1 // pred_check
      _
    $region35: #{tpu_custom_call.1} parent=1 // pred_check_branch
      %68 = sbr.rel (0) target = $region37
    $region36: #{tpu_custom_call.1} parent=1 // pred_region
      %70 = dma.done [#allocation6], 256
    $region37: #{tpu_custom_call.1} parent=1 // pred_fallthru
      _
    %v72 = vld [vmem:[#allocation2] sm:$0xf]
    %v73 = vld [vmem:[#allocation2 + $0x4] sm:$0xf]
    %v74 = vld [vmem:[#allocation5] sm:$0xf]
    %v75 = vld [vmem:[#allocation5 + $0x4] sm:$0xf]
    %v76 = vld [vmem:[#allocation5 + $0x8] sm:$0xf]
    %v77 = vld [vmem:[#allocation5 + $0xc] sm:$0xf]
    %v78 = vld [vmem:[%s2] sm:$0x1]
    %v80 = vperm.slane %v78, 0
    %v84 = vunpack.c.l.b16 %v72
    %v85 = vunpack.c.l.b16 %v73
    %v86 = vpack.c.b16 %v85, %v84
    %v91 = vunpack.c.l.b16 %v74
    %v92 = vunpack.c.l.b16 %v75
    %v93 = vunpack.c.l.b16 %v76
    %v94 = vunpack.c.l.b16 %v77
    %v95 = vpack.c.b16 %v92, %v91
    %v96 = vpack.c.b16 %v94, %v93
    %vm99 = vcmask 261120
    %v101 = vsel %vm99, %v86, 0
    %103 = vmatpush.bf16.msra.mxu0 0
    %104 = vmatpush.bf16.msra.mxu0 0
    %105 = vmatpush.bf16.msra.mxu0 0
    %106 = vmatpush.bf16.msra.mxu0 0
    %107 = vmatpush.bf16.msra.mxu0 0
    %108 = vmatpush.bf16.msra.mxu0 0
    %109 = vmatpush.bf16.msra.mxu0 %v96
    %110 = vmatpush.bf16.msra.mxu0 %v95
    %111 = vmatmul.bf16.gmra.mxu0 %v101
    %v112 = vpop.f32.mrf.mxu0
    %v113 = vadd.f32 %v80, %v112
    %v114 = vpop.f32.mrf.mxu0
    %v115 = vadd.f32 %v80, %v114
    %116 = vdwg.mxu0
    %v117 = vmul.f32 %v113, 0.5
    %v118 = vmul.f32 %v115, 0.5
    %v119 = vmul.f32 %v113, 0.044715
    %v120 = vmul.f32 %v115, 0.044715
    %v121 = vmul.f32 %v119, %v113
    %v122 = vmul.f32 %v120, %v115
    %v123 = vmul.f32 %v121, %v113
    %v124 = vmul.f32 %v122, %v115
    %v125 = vadd.f32 %v113, %v123
    %v126 = vadd.f32 %v115, %v124
    %v127 = vmul.f32 %v125, 0.7978846
    %v128 = vmul.f32 %v126, 0.7978846
    %v129 = vtanh.pop %v127
    %v130 = vtanh.pop %v128
    %v131 = vadd.f32 %v129, 1.0
    %v132 = vadd.f32 %v130, 1.0
    %v133 = vmul.f32 %v117, %v131
    %v134 = vmul.f32 %v118, %v132
    %v135 = vsel %vm99, %v133, 0.0
    %136 = vadd.xlane.f32.xlu0 %v135
    %v137 = vpop.xlane.xlu0 %136
    %v138 = vsel %vm99, %v134, 0.0
    %139 = vadd.xlane.f32.xlu0 %v138
    %v140 = vpop.xlane.xlu0 %139
    %v141 = vrcp.pop 32.0
    %v142 = vmul.f32 32.0, %v141
    %v143 = vsub.f32 1.0, %v142
    %v144 = vmul.f32 %v141, %v143
    %v145 = vadd.f32 %v141, %v144
    %vm146 = vweird.f32 %v141
    %v147 = vsel %vm146, %v141, %v145
    %v148 = vmul.f32 %v137, %v147
    %v149 = vmul.f32 %v140, %v147
    %v150 = vsub.f32 %v133, %v148
    %v151 = vsub.f32 %v134, %v149
    %v152 = vmul.f32 %v150, %v150
    %v153 = vmul.f32 %v151, %v151
    %v154 = vsel %vm99, %v152, 0.0
    %155 = vadd.xlane.f32.xlu0 %v154
    %v156 = vpop.xlane.xlu0 %155
    %v157 = vsel %vm99, %v153, 0.0
    %158 = vadd.xlane.f32.xlu0 %v157
    %v159 = vpop.xlane.xlu0 %158
    %v160 = vmul.f32 %v156, %v147
    %v161 = vmul.f32 %v159, %v147
    %v162 = vadd.f32 %v160, 1e-12
    %v163 = vadd.f32 %v161, 1e-12
    %v164 = vrsqrt.pop %v162
    %v165 = vmul.f32 %v164, %v162
    %v166 = vmul.f32 %v165, %v164
    %v167 = vmul.f32 0.5, %v166
    %v168 = vsub.f32 1.5, %v167
    %v169 = vmul.f32 %v164, %v168
    %vm170 = vweird.f32 %v162
    %vm171 = vweird.f32 %v164
    %vm172 = vmor %vm170, %vm171
    %v173 = vsel %vm172, %v164, %v169
    %v174 = vrsqrt.pop %v163
    %v175 = vmul.f32 %v174, %v163
    %v176 = vmul.f32 %v175, %v174
    %v177 = vmul.f32 0.5, %v176
    %v178 = vsub.f32 1.5, %v177
    %v179 = vmul.f32 %v174, %v178
    %vm180 = vweird.f32 %v163
    %vm181 = vweird.f32 %v174
    %vm182 = vmor %vm180, %vm181
    %v183 = vsel %vm182, %v174, %v179
    %v184 = vmul.f32 %v150, %v173
    %v185 = vmul.f32 %v151, %v183
    %v186 = vld [vmem:[%s3] sm:$0x1]
    %v188 = vperm.slane %v186, 0
    %v190 = vmul.f32 %v184, %v188
    %v191 = vmul.f32 %v185, %v188
    %v192 = vld [vmem:[%s4] sm:$0x1]
    %v194 = vperm.slane %v192, 0
    %v196 = vadd.f32 %v190, %v194
    %v197 = vadd.f32 %v191, %v194
    %v198 = vpack.c.bf16 %v197, %v196
    %v199 = vld [vmem:[#allocation7] sm:$0xf]
    %v200 = vld [vmem:[#allocation7 + $0x4] sm:$0xf]
    %v201 = vld [vmem:[#allocation7 + $0x8] sm:$0xf]
    %v202 = vld [vmem:[#allocation7 + $0xc] sm:$0xf]
    %v207 = vunpack.c.l.b16 %v199
    %v208 = vunpack.c.l.b16 %v200
    %v209 = vunpack.c.l.b16 %v201
    %v210 = vunpack.c.l.b16 %v202
    %v211 = vpack.c.b16 %v208, %v207
    %v212 = vpack.c.b16 %v210, %v209
    %v216 = vsel %vm99, %v198, 0
    %218 = vmatpush.bf16.msra.mxu0 0
    %219 = vmatpush.bf16.msra.mxu0 0
    %220 = vmatpush.bf16.msra.mxu0 0
    %221 = vmatpush.bf16.msra.mxu0 0
    %222 = vmatpush.bf16.msra.mxu0 0
    %223 = vmatpush.bf16.msra.mxu0 0
    %224 = vmatpush.bf16.msra.mxu0 %v212
    %225 = vmatpush.bf16.msra.mxu0 %v211
    %226 = vmatmul.bf16.gmra.mxu0 %v216
    %v227 = vpop.f32.mrf.mxu0
    %v228 = vadd.f32 0.0, %v227
    %v229 = vpop.f32.mrf.mxu0
    %v230 = vadd.f32 0.0, %v229
    %231 = vdwg.mxu0
    %v232 = vpack.c.bf16 %v228, %v228
    %v233 = vpack.c.bf16 %v230, %v230
    %234 = vst [vmem:[#allocation8] sm:$0xf] %v232
    %235 = vst [vmem:[#allocation8 + $0x4] sm:$0xf] %v233
    // Predicated region
    $region38: #{tpu_custom_call.1} parent=1 // pred_check
      _
    $region39: #{tpu_custom_call.1} parent=1 // pred_check_branch
      %237 = sbr.rel (0) target = $region41
    $region40: #{tpu_custom_call.1} parent=1 // pred_region
      %239 = vsyncadd [#allocation4], 0
      %s240 = sshll.u32 [#allocation8], 4
      %s241 = int_to_ptr.vmem [resolvable:$true] %s240
      %s242 = sshll.u32 %s6, 4
      %s243 = int_to_ptr.hbm [resolvable:$true] %s242
      %248 = dma.vmem_to_hbm [thread:$0]  %s241, 128, %s243, [#allocation4], 64, 64, 4
    $region41: #{tpu_custom_call.1} parent=1 // pred_fallthru
      _
    // Predicated region
    $region42: #{tpu_custom_call.1} parent=1 // pred_check
      _
    $region43: #{tpu_custom_call.1} parent=1 // pred_check_branch
      %250 = sbr.rel (0) target = $region45
    $region44: #{tpu_custom_call.1} parent=1 // pred_region
      %252 = dma.done [#allocation4], 128
    $region45: #{tpu_custom_call.1} parent=1 // pred_fallthru
      _
    %253 = vsyncpa [#allocation3], 1
    %254 = vsyncpa [#allocation6], 1
    %255 = vsyncpa [#allocation4], 1

</llo_original>
